<compile_context>
chip_gen: v7x
topology: tpu7x:2x2x1
jax: 0.10.0
libtpu: 0.0.40
codegen_flags: <defaults>
</compile_context>

<pallas_src>
import functools

import jax
import jax.numpy as jnp
from jax.experimental import pallas as pl
from jax.experimental.pallas import tpu as pltpu


def _round_up(x, m):
    return ((x + m - 1) // m) * m


def _cosface_kernel(logits_ref, labels_ref, out_ref, *, s, sm, tile_c):
    # logits_ref: (tile_n, tile_c) in the input dtype
    # labels_ref: (tile_n, 1) int32 (-1 => ignore row)
    j = pl.program_id(1)

    # Local target column for this class tile, computed on the tiny
    # (tile_n, 1) block.  labels == -1 (or targets outside this tile) can never
    # match the non-negative local iota, so no extra validity mask is needed.
    lab_local = labels_ref[...] - j * tile_c                       # (tile_n, 1)
    col = jax.lax.broadcasted_iota(jnp.int32, logits_ref.shape, 1)  # local iota
    is_target = col == lab_local                                    # broadcast over C

    x = logits_ref[...]
    dt = x.dtype
    # out = s*x - (s*m) * is_target   (compute in the input dtype)
    y = x * jnp.asarray(s, dt) - jnp.where(is_target,
                                           jnp.asarray(sm, dt),
                                           jnp.asarray(0, dt))
    out_ref[...] = y.astype(out_ref.dtype)


def _choose_tiles(N, C, itemsize, target_block_bytes=4 * 1024 * 1024):
    """Small-N / huge-C tiling: small row tile, class tile grown to ~4 MiB."""
    Np = _round_up(N, 8)
    Cp = _round_up(C, 128)

    # Row tile: CosFace typically has a small batch and an enormous class
    # count, so keep rows small (but multiple of 8) and spend VMEM on classes.
    tile_n = min(Np, 256)

    # Class tile: lane-dense multiple of 128, grown until the logits block is
    # ~target_block_bytes, capped at (rounded-up) full C.
    tile_c = max(128, (target_block_bytes // (tile_n * itemsize)) // 128 * 128)
    tile_c = min(tile_c, Cp)

    # Megacore: the class axis usually provides plenty of parallel blocks.
    # Only split rows when neither axis would otherwise have >= 2 blocks.
    if pl.cdiv(Cp, tile_c) < 2 and pl.cdiv(Np, tile_n) < 2 and N >= 16:
        tile_n = max(8, _round_up(pl.cdiv(N, 2), 8))
    return tile_n, tile_c


def cosface(logits, labels, *, s, m, tile_n=None, tile_c=None,
            vmem_limit_bytes=40 * 1024 * 1024, alias_input=False):
    """Pallas CosFace forward.

    Args:
      logits: [N, C] float array (dtype preserved; bf16 recommended).
      labels: [N] int array (-1 means "ignore this row").
      s, m:   python floats (scale / margin).
      alias_input: donate the logits buffer to the output (caller must not
        reuse `logits` afterwards — mirrors the in-place PyTorch semantics).
    Returns:
      [N, C] array, same dtype as `logits`.
    """
    N, C = logits.shape
    dtype = logits.dtype
    itemsize = jnp.dtype(dtype).itemsize

    tn, tc = _choose_tiles(N, C, itemsize)
    tile_n = tile_n or tn
    tile_c = tile_c or tc

    labels2d = labels.astype(jnp.int32).reshape(N, 1)

    # No explicit padding: Pallas masks partial edge blocks (reads in the
    # padded region are garbage but those outputs are never written back).
    grid = (pl.cdiv(N, tile_n), pl.cdiv(C, tile_c))

    kernel = functools.partial(
        _cosface_kernel, s=float(s), sm=float(s) * float(m), tile_c=tile_c)

    out = pl.pallas_call(
        kernel,
        out_shape=jax.ShapeDtypeStruct((N, C), dtype),
        grid_spec=pltpu.PrefetchScalarGridSpec(
            num_scalar_prefetch=0,
            grid=grid,
            in_specs=[
                pl.BlockSpec((tile_n, tile_c), lambda i, j: (i, j)),
                # Labels block ignores the class axis -> not re-DMA'd per C tile.
                pl.BlockSpec((tile_n, 1), lambda i, j: (i, 0)),
            ],
            out_specs=pl.BlockSpec((tile_n, tile_c), lambda i, j: (i, j)),
        ),
        compiler_params=pltpu.CompilerParams(
            dimension_semantics=("parallel", "parallel"),
            vmem_limit_bytes=vmem_limit_bytes,
        ),
        input_output_aliases={0: 0} if alias_input else {},
    )(logits, labels2d)
    return out


def cosface_ref(logits, labels, *, s, m):
    """Pure-JAX reference mirroring the PyTorch forward."""
    N, C = logits.shape
    valid = labels != -1
    one_hot = (jnp.arange(C)[None, :] == labels[:, None]) & valid[:, None]
    x = logits.astype(jnp.float32)
    return ((x - jnp.where(one_hot, jnp.float32(m), jnp.float32(0.0)))
            * jnp.float32(s)).astype(logits.dtype)


if __name__ == "__main__":
    key = jax.random.PRNGKey(0)
    k1, k2, k3, k4 = jax.random.split(key, 4)

    s_param, m_param = 64.0, 0.35   # CosFace(parameters=[s, m])

    # --- small f32 test (divides evenly) ---
    N, C = 64, 512
    logits = jax.random.normal(k1, (N, C), dtype=jnp.float32)
    labels = jax.random.randint(k2, (N,), 0, C, dtype=jnp.int32)
    labels = labels.at[0].set(-1).at[5].set(-1)   # "ignore" rows, like labels != -1

    out = jax.block_until_ready(cosface(logits, labels, s=s_param, m=m_param))
    ref = cosface_ref(logits, labels, s=s_param, m=m_param)
    assert out.shape == (N, C) and out.dtype == jnp.float32
    assert jnp.allclose(out, ref, atol=1e-3, rtol=1e-5), "f32 mismatch vs reference"

    # --- bf16 I/O test (compute stays in bf16 in-kernel) ---
    logits_bf16 = logits.astype(jnp.bfloat16)
    out_bf16 = jax.block_until_ready(
        cosface(logits_bf16, labels, s=s_param, m=m_param))
    ref_bf16 = cosface_ref(logits_bf16, labels, s=s_param, m=m_param)
    assert out_bf16.dtype == jnp.bfloat16
    assert jnp.allclose(out_bf16.astype(jnp.float32),
                        ref_bf16.astype(jnp.float32), atol=1.0, rtol=1e-2)

    # --- ragged shapes (not divisible by tiles -> Pallas edge-block masking,
    #     no explicit pad/slice) ---
    N2, C2 = 50, 300
    logits2 = jax.random.normal(k3, (N2, C2), dtype=jnp.float32)
    labels2 = jax.random.randint(k4, (N2,), 0, C2, dtype=jnp.int32)
    labels2 = labels2.at[3].set(-1)
    out2 = jax.block_until_ready(cosface(logits2, labels2, s=s_param, m=m_param))
    ref2 = cosface_ref(logits2, labels2, s=s_param, m=m_param)
    assert out2.shape == (N2, C2)
    assert jnp.allclose(out2, ref2, atol=1e-3, rtol=1e-5), "ragged mismatch"

    print("KERNEL_OK")
</pallas_src>

<mosaic_0001>
module attributes {stable_mosaic.version = 11 : i64} {
  func.func @_cosface_kernel(%arg0: i32, %arg1: i32, %arg2: memref<32x512xf32, #tpu.memory_space<vmem>>, %arg3: memref<32x1xi32, #tpu.memory_space<vmem>>, %arg4: memref<32x512xf32, #tpu.memory_space<vmem>>) attributes {dimension_semantics = [#tpu.dimension_semantics<parallel>, #tpu.dimension_semantics<parallel>], iteration_bounds = array<i64: 2, 1>, scalar_prefetch = 0 : i64, scratch_operands = 0 : i64, tpu.core_type = #tpu.core_type<tc>, window_params = [{transform_indices = @transform_0, window_bounds = array<i64: 32, 512>}, {transform_indices = @transform_1, window_bounds = array<i64: 32, 1>}, {transform_indices = @transform_2, window_bounds = array<i64: 32, 512>}]} {
    %c0 = arith.constant 0 : index
    %c0_0 = arith.constant 0 : index
    %0 = vector.load %arg3[%c0, %c0_0] : memref<32x1xi32, #tpu.memory_space<vmem>>, vector<32x1xi32>
    %c512_i32 = arith.constant 512 : i32
    %1 = arith.muli %arg1, %c512_i32 : i32
    %2 = vector.broadcast %1 : i32 to vector<32x1xi32>
    %3 = arith.subi %0, %2 : vector<32x1xi32>
    %4 = tpu.iota {dimensions = array<i32: 1>} : vector<32x512xi32>
    %5 = vector.broadcast %3 : vector<32x1xi32> to vector<32x512xi32>
    %6 = arith.cmpi eq, %4, %5 : vector<32x512xi32>
    %c0_1 = arith.constant 0 : index
    %c0_2 = arith.constant 0 : index
    %7 = vector.load %arg2[%c0_1, %c0_2] : memref<32x512xf32, #tpu.memory_space<vmem>>, vector<32x512xf32>
    %cst = arith.constant 6.400000e+01 : f32
    %8 = vector.broadcast %cst : f32 to vector<32x512xf32>
    %9 = arith.mulf %7, %8 : vector<32x512xf32>
    %cst_3 = arith.constant 2.240000e+01 : f32
    %cst_4 = arith.constant 0.000000e+00 : f32
    %10 = vector.broadcast %cst_3 : f32 to vector<32x512xf32>
    %11 = vector.broadcast %cst_4 : f32 to vector<32x512xf32>
    %12 = arith.select %6, %10, %11 : vector<32x512xi1>, vector<32x512xf32>
    %13 = arith.subf %9, %12 : vector<32x512xf32>
    %c0_5 = arith.constant 0 : index
    %c0_6 = arith.constant 0 : index
    %14 = vector.load %arg4[%c0_5, %c0_6] : memref<32x512xf32, #tpu.memory_space<vmem>>, vector<32x512xf32>
    tpu.vector_store %arg4[%c0_5, %c0_6], %13 {strides = array<i32>} : memref<32x512xf32, #tpu.memory_space<vmem>>, vector<32x512xf32>,
    return
  }
  func.func @transform_0(%arg0: i32, %arg1: i32) -> (i32, i32) {
    %c0_i32 = arith.constant 0 : i32
    return %arg0, %arg1 : i32, i32
  }
  func.func @transform_1(%arg0: i32, %arg1: i32) -> (i32, i32) {
    %c0_i32 = arith.constant 0 : i32
    %c0_i32_0 = arith.constant 0 : i32
    return %arg0, %c0_i32 : i32, i32
  }
  func.func @transform_2(%arg0: i32, %arg1: i32) -> (i32, i32) {
    %c0_i32 = arith.constant 0 : i32
    return %arg0, %arg1 : i32, i32
  }
}

</mosaic_0001>

<llo_original>
// kernel: tpu_custom_call.1
$region0: #{tpu_custom_call.1}
  #allocation0 [shape = 'u32[]', space=smem, size = 0x4, offset = 0x4, fixed_abs, tag = 'smem constant byte address 0x4 - core index']
  #allocation1 [shape = 'u32[144,128]{1,0:T(1,128)}', space=vmem, size = 0x12000, scoped, tag = 'internal scratch']
  %s0 = inlined_call_operand.hbm [shape: f32[64,512], index: 0, kind: input, shape index: {}]
  %s1 = inlined_call_operand.vmem [shape: s32[64,1], index: 1, kind: input, shape index: {}]
  %s2 = inlined_call_operand.hbm [shape: f32[64,512], index: 2, kind: output, shape index: {}]
  %s3 = sld [smem:[#allocation0]]
  $region45: #{tpu_custom_call.1} parent=0
    _
  %s5 = ssub.s32 1, %s3
  %s6 = scalar_select 0, %s5, %s3
  $region1: #{tpu_custom_call.1} parent=0
    #allocation2 [shape = 'u8[131072]{0}', space=vmem, size = 0x20000, scoped, tag = 'input window, operand 0']
    #allocation3 [shape = 's32[2]{0}', space=sflag, size = 0x8, scoped, tag = 'scoped memory for tpu_custom_call.1']
    #allocation4 [shape = 's32[2]{0}', space=sflag, size = 0x8, scoped, tag = 'scoped memory for tpu_custom_call.1']
    #allocation5 [shape = 'u8[131072]{0}', space=vmem, size = 0x20000, scoped, tag = 'output window, operand 0']
    %7 = vsyncpa [#allocation3], 0
    %s8 = scalar_lea.sflag [#allocation3], 1
    %9 = vsyncpa %s8, 0
    %10 = vsyncpa [#allocation4], 0
    %s11 = scalar_lea.sflag [#allocation4], 1
    %12 = vsyncpa %s11, 0
    loop: start=0, step=1, limit=4
    $region2: #{tpu_custom_call.1} parent=1 // loop_pre_header
      _
    $region3: #{tpu_custom_call.1} parent=1 // loop_header
      %s14 = sphi 0, %s18
      %p15 = scmp.ge.s32.totalorder %s14, 4
      %s21 = sphi 0, %s33
      %s22 = sphi 0, %s29
      %s23 = sphi 0, %s21
      %s24 = sphi 0, %s22
      %s25 = sphi 0, %s23
      %s26 = sphi 0, %s24
      %s38 = sphi 0, %s40
      %s41 = sphi 0, %s38
      %s42 = sphi 0, %s41
      %s58 = sphi 0, %s42
      %s64 = sphi 0, %s66
      %s67 = sphi 0, %s64
      %s68 = sphi 0, %s67
      %s84 = sphi 0, %s68
      %s92 = sphi 0, %s94
      %s95 = sphi 0, %s92
      %s96 = sphi 0, %s95
      %s112 = sphi 0, %s96
    $region4: #{tpu_custom_call.1} parent=1 // loop_header_branch
      %17 = sbr.rel (%p15) target = $region8
    $region5: #{tpu_custom_call.1} parent=1 // loop_body
      %s19 = ssub.s32 %s14, 1
      %s20 = ssub.s32 %s14, 2
      %s27 = sadd.s32 1, %s22
      %p28 = scmp.ge.s32.totalorder %s27, 1
      %s29 = scalar_select %p28, 0, %s27
      %s30 = sadd.s32 1, %s21
      %s31 = scalar_select %p28, %s30, %s21
      %p32 = scmp.ge.s32.totalorder %s31, 2
      %s33 = scalar_select %p32, 0, %s31
      %s34 = ssub.s32 %s21, %s33
      %s35 = ssub.s32 %s22, %s29
      %s36 = sor.u32 %s34, %s35
      %p37 = scmp.eq.s32.totalorder %s36, 0
      %s39 = sadd.s32 %s38, 1
      %s40 = scalar_select %p37, %s38, %s39
      %p43 = pneg %p37
      %p44 = scmp.eq.s32.totalorder %s14, 1
      %p45 = por %p43, %p44
      %p46 = scmp.ne.s32.totalorder %s38, %s41
      %p47 = scmp.eq.s32.totalorder %s14, 0
      %p48 = por %p46, %p47
      %p49 = scmp.ne.s32.totalorder %s38, %s41
      %p50 = scmp.eq.s32.totalorder %s19, 1
      %p51 = por %p49, %p50
      %p52 = scmp.ne.s32.totalorder %s41, %s42
      %p53 = scmp.eq.s32.totalorder %s19, 0
      %p54 = por %p52, %p53
      %p55 = scmp.ne.s32.totalorder %s41, %s42
      %p56 = scmp.eq.s32.totalorder %s20, 1
      %p57 = por %p55, %p56
      %p59 = scmp.ne.s32.totalorder %s42, %s58
      %p60 = scmp.eq.s32.totalorder %s20, 0
      %p61 = por %p59, %p60
      %s62 = ssub.s32 %s21, %s33
      %p63 = scmp.eq.s32.totalorder %s62, 0
      %s65 = sadd.s32 %s64, 1
      %s66 = scalar_select %p63, %s64, %s65
      %p69 = pneg %p63
      %p70 = scmp.eq.s32.totalorder %s14, 1
      %p71 = por %p69, %p70
      %p72 = scmp.ne.s32.totalorder %s64, %s67
      %p73 = scmp.eq.s32.totalorder %s14, 0
      %p74 = por %p72, %p73
      %p75 = scmp.ne.s32.totalorder %s64, %s67
      %p76 = scmp.eq.s32.totalorder %s19, 1
      %p77 = por %p75, %p76
      %p78 = scmp.ne.s32.totalorder %s67, %s68
      %p79 = scmp.eq.s32.totalorder %s19, 0
      %p80 = por %p78, %p79
      %p81 = scmp.ne.s32.totalorder %s67, %s68
      %p82 = scmp.eq.s32.totalorder %s20, 1
      %p83 = por %p81, %p82
      %p85 = scmp.ne.s32.totalorder %s68, %s84
      %p86 = scmp.eq.s32.totalorder %s20, 0
      %p87 = por %p85, %p86
      %s88 = ssub.s32 %s21, %s33
      %s89 = ssub.s32 %s22, %s29
      %s90 = sor.u32 %s88, %s89
      %p91 = scmp.eq.s32.totalorder %s90, 0
      %s93 = sadd.s32 %s92, 1
      %s94 = scalar_select %p91, %s92, %s93
      %p97 = pneg %p91
      %p98 = scmp.eq.s32.totalorder %s14, 1
      %p99 = por %p97, %p98
      %p100 = scmp.ne.s32.totalorder %s92, %s95
      %p101 = scmp.eq.s32.totalorder %s14, 0
      %p102 = por %p100, %p101
      %p103 = scmp.ne.s32.totalorder %s92, %s95
      %p104 = scmp.eq.s32.totalorder %s19, 1
      %p105 = por %p103, %p104
      %p106 = scmp.ne.s32.totalorder %s95, %s96
      %p107 = scmp.eq.s32.totalorder %s19, 0
      %p108 = por %p106, %p107
      %p109 = scmp.ne.s32.totalorder %s95, %s96
      %p110 = scmp.eq.s32.totalorder %s20, 1
      %p111 = por %p109, %p110
      %p113 = scmp.ne.s32.totalorder %s96, %s112
      %p114 = scmp.eq.s32.totalorder %s20, 0
      %p115 = por %p113, %p114
      %p116 = scmp.le.s32.totalorder 1, %s14
      %p117 = scmp.lt.s32.totalorder %s14, 3
      %p118 = pnand %p116, %p117
      %p119 = pneg %p118
      // Predicated region
      $region9: #{tpu_custom_call.1} parent=5 // pred_check
        _
      $region10: #{tpu_custom_call.1} parent=5 // pred_check_branch
        %121 = sbr.rel (%p118) target = $region12
      $region11: #{tpu_custom_call.1} parent=5 // pred_region
        %s122 = ssub.s32 %s14, 1
      $region12: #{tpu_custom_call.1} parent=5 // pred_fallthru
        _
      %p123 = scmp.lt.s32.totalorder %s14, 2
      // Predicated region
      $region13: #{tpu_custom_call.1} parent=5 // pred_check
        %p124 = pneg %p123
      $region14: #{tpu_custom_call.1} parent=5 // pred_check_branch
        %126 = sbr.rel (%p124) target = $region16
      $region15: #{tpu_custom_call.1} parent=5 // pred_region
        // Predicated region
        $region17: #{tpu_custom_call.1} parent=15 // pred_check
          %p127 = pneg %p48
        $region18: #{tpu_custom_call.1} parent=15 // pred_check_branch
          %129 = sbr.rel (%p127) target = $region20
        $region19: #{tpu_custom_call.1} parent=15 // pred_region
          %s130 = sand.u32 %s38, 1
          %s131 = scalar_lea.sflag [#allocation3], %s130
          %s132 = sand.u32 %s38, 1
          %s133 = smul.addr %s132, 128
          %s134 = scalar_lea.vmem [#allocation2], %s133
          %s135 = smul.u32 4, %s21
          %s136 = smul.u32 4, %s22
          %s138 = ssub.s32 2048, 2048
          %139 = vsyncadd %s131, %s138
          %s140 = smul.addr %s135, 4
          %s141 = sadd.s32 %s136, %s140
          %s142 = smul.addr %s141, 128
          %s143 = scalar_lea.hbm %s0, %s142
          %s144 = sshll.u32 %s134, 4
          %s145 = int_to_ptr.vmem [resolvable:$true] %s144
          %150 = dma.hbm_to_vmem [thread:$0]  %s143, 2048, %s145, %s131, 512, 512, 32
        $region20: #{tpu_custom_call.1} parent=15 // pred_fallthru
          _
        // Predicated region
        $region21: #{tpu_custom_call.1} parent=15 // pred_check
          %p151 = pneg %p74
        $region22: #{tpu_custom_call.1} parent=15 // pred_check_branch
          %153 = sbr.rel (%p151) target = $region24
        $region23: #{tpu_custom_call.1} parent=15 // pred_region
          %s154 = smul.u32 4, %s21
          %p155 = scmp.lt.s32.totalorder %s154, 7
          %s156 = scalar_select %p155, %s154, 7
          %s157 = smul.addr %s156, 8
          %s158 = scalar_lea.vmem %s1, %s157
          %s159 = smul.u32 4, %s21
        $region24: #{tpu_custom_call.1} parent=15 // pred_fallthru
          _
      $region16: #{tpu_custom_call.1} parent=5 // pred_fallthru
        _
      %p160 = scmp.le.s32.totalorder 1, %s14
      %p161 = scmp.lt.s32.totalorder %s14, 3
      %p162 = pnand %p160, %p161
      %p163 = pneg %p162
      // Predicated region
      $region25: #{tpu_custom_call.1} parent=5 // pred_check
        _
      $region26: #{tpu_custom_call.1} parent=5 // pred_check_branch
        %165 = sbr.rel (%p162) target = $region28
      $region27: #{tpu_custom_call.1} parent=5 // pred_region
        %s166 = ssub.s32 %s14, 1
        %s167 = sand.u32 %s41, 1
        %s168 = scalar_lea.sflag [#allocation3], %s167
        %s169 = sand.u32 %s41, 1
        %s170 = smul.addr %s169, 128
        %s171 = scalar_lea.vmem [#allocation2], %s170
        // Predicated region
        $region29: #{tpu_custom_call.1} parent=27 // pred_check
          %p172 = pneg %p54
        $region30: #{tpu_custom_call.1} parent=27 // pred_check_branch
          %174 = sbr.rel (%p172) target = $region32
        $region31: #{tpu_custom_call.1} parent=27 // pred_region
          %175 = dma.done %s168, 2048
        $region32: #{tpu_custom_call.1} parent=27 // pred_fallthru
          _
        %s176 = sand.u32 %s41, 1
        %s177 = scalar_lea.sflag [#allocation3], %s176
        %s178 = sand.u32 %s41, 1
        %s179 = smul.addr %s178, 128
        %s180 = scalar_lea.vmem [#allocation2], %s179
        %p181 = pneg %p54
        %p182 = pneg %p51
        %s183 = smul.u32 4, %s23
        %p184 = scmp.lt.s32.totalorder %s183, 7
        %s185 = scalar_select %p184, %s183, 7
        %s186 = smul.addr %s185, 8
        %s187 = scalar_lea.vmem %s1, %s186
        %p188 = pneg %p80
        %p189 = pneg %p77
        %p190 = pneg %p108
        %p191 = pneg %p105
        %s192 = sand.u32 %s95, 1
        %s193 = scalar_lea.sflag [#allocation4], %s192
        %s194 = sand.u32 %s95, 1
        %s195 = smul.addr %s194, 128
        %s196 = scalar_lea.vmem [#allocation5], %s195
        %s197 = smul.u32 4, %s23
        %s198 = smul.u32 4, %s24
        %s199 = smul.u32 4, %s23
        %p200 = scmp.lt.s32.totalorder %s199, 7
        %s201 = scalar_select %p200, %s199, 7
        %s202 = smul.addr %s201, 8
        %s203 = scalar_lea.vmem %s1, %s202
        %s204 = smul.u32 4, %s23
        %s205 = smul.u32 4, %s23
        %s206 = smul.u32 4, %s24
        %v207 = vld [vmem:[%s203] sm:$0xff]
        %v208 = vld [vmem:[%s203 + $0x8] sm:$0xff]
        %v209 = vld [vmem:[%s203 + $0x10] sm:$0xff]
        %v210 = vld [vmem:[%s203 + $0x18] sm:$0xff]
        %s211 = smul.u32 %s24, 512
        %v212 = vstv %s211
        %v213 = vsub.s32 %v207, %v212
        %v214 = vsub.s32 %v208, %v212
        %v215 = vsub.s32 %v209, %v212
        %v216 = vsub.s32 %v210, %v212
        %v217 = vlaneseq
        %v218 = vand.u32 %v217, 127
        %v219 = vadd.s32 %v218, 128
        %v220 = vadd.s32 %v218, 256
        %v221 = vadd.s32 %v218, 384
        %222 = vset.pattern.permute.xlu0 0
        %223 = vperm.xlu0 %222, %v213
        %v224 = vpop.permute.xlu0 %223
        %225 = vset.pattern.permute.xlu0 0
        %226 = vperm.xlu0 %225, %v214
        %v227 = vpop.permute.xlu0 %226
        %228 = vset.pattern.permute.xlu0 0
        %229 = vperm.xlu0 %228, %v215
        %v230 = vpop.permute.xlu0 %229
        %231 = vset.pattern.permute.xlu0 0
        %232 = vperm.xlu0 %231, %v216
        %v233 = vpop.permute.xlu0 %232
        %vm234 = vcmp.eq.s32.totalorder %v218, %v224
        %vm235 = vcmp.eq.s32.totalorder %v219, %v224
        %vm236 = vcmp.eq.s32.totalorder %v220, %v224
        %vm237 = vcmp.eq.s32.totalorder %v221, %v224
        %vm238 = vcmp.eq.s32.totalorder %v218, %v227
        %vm239 = vcmp.eq.s32.totalorder %v219, %v227
        %vm240 = vcmp.eq.s32.totalorder %v220, %v227
        %vm241 = vcmp.eq.s32.totalorder %v221, %v227
        %vm242 = vcmp.eq.s32.totalorder %v218, %v230
        %vm243 = vcmp.eq.s32.totalorder %v219, %v230
        %vm244 = vcmp.eq.s32.totalorder %v220, %v230
        %vm245 = vcmp.eq.s32.totalorder %v221, %v230
        %vm246 = vcmp.eq.s32.totalorder %v218, %v233
        %vm247 = vcmp.eq.s32.totalorder %v219, %v233
        %vm248 = vcmp.eq.s32.totalorder %v220, %v233
        %vm249 = vcmp.eq.s32.totalorder %v221, %v233
        %v250 = vld [vmem:[%s171] sm:$0xff]
        %v251 = vld [vmem:[%s171 + $0x8] sm:$0xff]
        %v252 = vld [vmem:[%s171 + $0x10] sm:$0xff]
        %v253 = vld [vmem:[%s171 + $0x18] sm:$0xff]
        %v254 = vld [vmem:[%s171 + $0x20] sm:$0xff]
        %v255 = vld [vmem:[%s171 + $0x28] sm:$0xff]
        %v256 = vld [vmem:[%s171 + $0x30] sm:$0xff]
        %v257 = vld [vmem:[%s171 + $0x38] sm:$0xff]
        %v258 = vld [vmem:[%s171 + $0x40] sm:$0xff]
        %v259 = vld [vmem:[%s171 + $0x48] sm:$0xff]
        %v260 = vld [vmem:[%s171 + $0x50] sm:$0xff]
        %v261 = vld [vmem:[%s171 + $0x58] sm:$0xff]
        %v262 = vld [vmem:[%s171 + $0x60] sm:$0xff]
        %v263 = vld [vmem:[%s171 + $0x68] sm:$0xff]
        %v264 = vld [vmem:[%s171 + $0x70] sm:$0xff]
        %v265 = vld [vmem:[%s171 + $0x78] sm:$0xff]
        %v266 = vmul.f32 %v250, 64.0
        %v267 = vmul.f32 %v251, 64.0
        %v268 = vmul.f32 %v252, 64.0
        %v269 = vmul.f32 %v253, 64.0
        %v270 = vmul.f32 %v254, 64.0
        %v271 = vmul.f32 %v255, 64.0
        %v272 = vmul.f32 %v256, 64.0
        %v273 = vmul.f32 %v257, 64.0
        %v274 = vmul.f32 %v258, 64.0
        %v275 = vmul.f32 %v259, 64.0
        %v276 = vmul.f32 %v260, 64.0
        %v277 = vmul.f32 %v261, 64.0
        %v278 = vmul.f32 %v262, 64.0
        %v279 = vmul.f32 %v263, 64.0
        %v280 = vmul.f32 %v264, 64.0
        %v281 = vmul.f32 %v265, 64.0
        %v282 = vsel %vm234, 22.4, 0.0
        %v283 = vsel %vm235, 22.4, 0.0
        %v284 = vsel %vm236, 22.4, 0.0
        %v285 = vsel %vm237, 22.4, 0.0
        %v286 = vsel %vm238, 22.4, 0.0
        %v287 = vsel %vm239, 22.4, 0.0
        %v288 = vsel %vm240, 22.4, 0.0
        %v289 = vsel %vm241, 22.4, 0.0
        %v290 = vsel %vm242, 22.4, 0.0
        %v291 = vsel %vm243, 22.4, 0.0
        %v292 = vsel %vm244, 22.4, 0.0
        %v293 = vsel %vm245, 22.4, 0.0
        %v294 = vsel %vm246, 22.4, 0.0
        %v295 = vsel %vm247, 22.4, 0.0
        %v296 = vsel %vm248, 22.4, 0.0
        %v297 = vsel %vm249, 22.4, 0.0
        %v298 = vsub.f32 %v266, %v282
        %v299 = vsub.f32 %v267, %v283
        %v300 = vsub.f32 %v268, %v284
        %v301 = vsub.f32 %v269, %v285
        %v302 = vsub.f32 %v270, %v286
        %v303 = vsub.f32 %v271, %v287
        %v304 = vsub.f32 %v272, %v288
        %v305 = vsub.f32 %v273, %v289
        %v306 = vsub.f32 %v274, %v290
        %v307 = vsub.f32 %v275, %v291
        %v308 = vsub.f32 %v276, %v292
        %v309 = vsub.f32 %v277, %v293
        %v310 = vsub.f32 %v278, %v294
        %v311 = vsub.f32 %v279, %v295
        %v312 = vsub.f32 %v280, %v296
        %v313 = vsub.f32 %v281, %v297
        %314 = vst [vmem:[%s196] sm:$0xff] %v298
        %315 = vst [vmem:[%s196 + $0x8] sm:$0xff] %v299
        %316 = vst [vmem:[%s196 + $0x10] sm:$0xff] %v300
        %317 = vst [vmem:[%s196 + $0x18] sm:$0xff] %v301
        %318 = vst [vmem:[%s196 + $0x20] sm:$0xff] %v302
        %319 = vst [vmem:[%s196 + $0x28] sm:$0xff] %v303
        %320 = vst [vmem:[%s196 + $0x30] sm:$0xff] %v304
        %321 = vst [vmem:[%s196 + $0x38] sm:$0xff] %v305
        %322 = vst [vmem:[%s196 + $0x40] sm:$0xff] %v306
        %323 = vst [vmem:[%s196 + $0x48] sm:$0xff] %v307
        %324 = vst [vmem:[%s196 + $0x50] sm:$0xff] %v308
        %325 = vst [vmem:[%s196 + $0x58] sm:$0xff] %v309
        %326 = vst [vmem:[%s196 + $0x60] sm:$0xff] %v310
        %327 = vst [vmem:[%s196 + $0x68] sm:$0xff] %v311
        %328 = vst [vmem:[%s196 + $0x70] sm:$0xff] %v312
        %329 = vst [vmem:[%s196 + $0x78] sm:$0xff] %v313
        %s330 = sand.u32 %s95, 1
        %s331 = scalar_lea.sflag [#allocation4], %s330
        %s332 = sand.u32 %s95, 1
        %s333 = smul.addr %s332, 128
        %s334 = scalar_lea.vmem [#allocation5], %s333
        // Predicated region
        $region33: #{tpu_custom_call.1} parent=27 // pred_check
          %p335 = pneg %p105
        $region34: #{tpu_custom_call.1} parent=27 // pred_check_branch
          %337 = sbr.rel (%p335) target = $region36
        $region35: #{tpu_custom_call.1} parent=27 // pred_region
          %s338 = smul.u32 4, %s23
          %s339 = smul.u32 4, %s24
          %s341 = ssub.s32 2048, 2048
          %342 = vsyncadd %s331, %s341
          %s343 = smul.addr %s338, 4
          %s344 = sadd.s32 %s339, %s343
          %s345 = smul.addr %s344, 128
          %s346 = scalar_lea.hbm %s2, %s345
          %s347 = sshll.u32 %s334, 4
          %s348 = int_to_ptr.vmem [resolvable:$true] %s347
          %353 = dma.vmem_to_hbm [thread:$0]  %s348, 2048, %s346, %s331, 512, 512, 32
        $region36: #{tpu_custom_call.1} parent=27 // pred_fallthru
          _
      $region28: #{tpu_custom_call.1} parent=5 // pred_fallthru
        _
      %p354 = scmp.le.s32.totalorder 2, %s14
      // Predicated region
      $region37: #{tpu_custom_call.1} parent=5 // pred_check
        %p355 = pneg %p354
      $region38: #{tpu_custom_call.1} parent=5 // pred_check_branch
        %357 = sbr.rel (%p355) target = $region40
      $region39: #{tpu_custom_call.1} parent=5 // pred_region
        %s358 = ssub.s32 %s14, 2
        // Predicated region
        $region41: #{tpu_custom_call.1} parent=39 // pred_check
          %p359 = pneg %p111
        $region42: #{tpu_custom_call.1} parent=39 // pred_check_branch
          %361 = sbr.rel (%p359) target = $region44
        $region43: #{tpu_custom_call.1} parent=39 // pred_region
          %s362 = sand.u32 %s96, 1
          %s363 = scalar_lea.sflag [#allocation4], %s362
          %s364 = sand.u32 %s96, 1
          %s365 = smul.addr %s364, 128
          %s366 = scalar_lea.vmem [#allocation5], %s365
          %367 = dma.done %s363, 2048
        $region44: #{tpu_custom_call.1} parent=39 // pred_fallthru
          _
      $region40: #{tpu_custom_call.1} parent=5 // pred_fallthru
        _
    $region6: #{tpu_custom_call.1} parent=1 // loop_footer
      %s18 = sadd.s32 1, %s14
    $region7: #{tpu_custom_call.1} parent=1 // loop_footer_branch
      %13 = sbr.rel target = $region3
    $region8: #{tpu_custom_call.1} parent=1 // loop_exit
      _
    %368 = vsyncpa [#allocation3], 1
    %s369 = scalar_lea.sflag [#allocation3], 1
    %370 = vsyncpa %s369, 1
    %371 = vsyncpa [#allocation4], 1
    %s372 = scalar_lea.sflag [#allocation4], 1
    %373 = vsyncpa %s372, 1

</llo_original>
